<compile_context>
chip_gen: v7x
topology: tpu7x:2x2x1
jax: 0.10.0
libtpu: 0.0.40
codegen_flags: <defaults>
</compile_context>

<pallas_src>
import jax
import jax.numpy as jnp
from jax import lax
from jax.experimental import pallas as pl
from jax.experimental.pallas import tpu as pltpu


def _tanh_kernel(x_ref, o_ref):
    # Elementwise tanh on the current (block_rows, lane) tile (EUP op).
    o_ref[...] = jnp.tanh(x_ref[...])


_LANE_CHOICES = (2048, 1024, 512, 256, 128)
_TARGET_BLOCK_BYTES = 4 << 20  # ~4 MiB per pipeline buffer


def _slab_geometry(n):
    """Pick (lane, rows, pad) for a flattened length-n float32 plane."""
    for lane in _LANE_CHOICES:
        if n % lane == 0:
            return lane, n // lane, 0
    lane = 128
    padded = pl.cdiv(n, lane) * lane
    return lane, padded // lane, padded - n


@jax.jit
def complex_tanh(x):
    """complex64 array -> complex(tanh(real), tanh(imag)), same shape."""
    if x.dtype != jnp.complex64:
        # TODO(synk): complex128 path (would need an f64 kernel); PyTorch
        # preserves the input precision, so reject rather than silently narrow.
        raise NotImplementedError(
            f"complex_tanh Pallas kernel supports complex64 only, got {x.dtype}")

    orig_shape = x.shape
    re = jnp.real(x)
    im = jnp.imag(x)
    n = int(re.size)

    lane, rows, pad = _slab_geometry(n)
    re_flat = re.reshape(-1)
    im_flat = im.reshape(-1)
    if pad:
        # Ragged size only: tanh(0)=0 and the tail is sliced off below.
        re_flat = jnp.pad(re_flat, (0, pad))
        im_flat = jnp.pad(im_flat, (0, pad))

    # Fuse both planes into one slab: rows [0, rows) = real, [rows, 2*rows) = imag.
    total_rows = 2 * rows
    slab = jnp.concatenate([re_flat, im_flat]).reshape(total_rows, lane)

    # Block sizing: ~4 MiB per buffer; guarantee >= 2 grid steps whenever the
    # slab is big enough so v7x megacore sharding + double buffering engage.
    target_rows = max(8, (_TARGET_BLOCK_BYTES // (lane * 4)) // 8 * 8)
    if total_rows >= 16:
        half_rows = max(8, (total_rows // 2) // 8 * 8)
        block_rows = min(target_rows, half_rows)
    else:
        block_rows = total_rows  # tiny input: single full-extent block (legal)
    grid = (pl.cdiv(total_rows, block_rows),)

    block_bytes = block_rows * lane * 4
    # 1 input + 1 output, double buffered => 4 x block_bytes live, plus headroom.
    vmem_limit = min(max(4 * block_bytes + (8 << 20), 16 << 20), 32 << 20)

    spec = pl.BlockSpec((block_rows, lane), lambda i: (i, 0))

    out2d = pl.pallas_call(
        _tanh_kernel,
        out_shape=jax.ShapeDtypeStruct((total_rows, lane), jnp.float32),
        grid_spec=pltpu.PrefetchScalarGridSpec(
            num_scalar_prefetch=0,
            grid=grid,
            in_specs=[spec],
            out_specs=spec,
        ),
        compiler_params=pltpu.CompilerParams(
            dimension_semantics=("parallel",),
            vmem_limit_bytes=vmem_limit,
        ),
        cost_estimate=pl.CostEstimate(
            flops=0,
            transcendentals=total_rows * lane,
            bytes_accessed=2 * total_rows * lane * 4,
        ),
        # The slab is a wrapper-local intermediate; compute tanh in place.
        input_output_aliases={0: 0},
    )(slab)

    tanh_re = out2d[:rows].reshape(-1)
    tanh_im = out2d[rows:].reshape(-1)
    if pad:
        tanh_re = tanh_re[:n]
        tanh_im = tanh_im[:n]
    return lax.complex(tanh_re.reshape(orig_shape), tanh_im.reshape(orig_shape))


if __name__ == "__main__":
    key = jax.random.PRNGKey(0)
    k_re, k_im = jax.random.split(key)
    shape = (2, 4, 16, 16)  # batch=2, channels=4, spatial=16x16
    x_re = jax.random.normal(k_re, shape, dtype=jnp.float32)
    x_im = jax.random.normal(k_im, shape, dtype=jnp.float32)
    x = lax.complex(x_re, x_im)  # complex64 input

    out = jax.block_until_ready(complex_tanh(x))

    # Reference (plain JAX): complex(tanh(real), tanh(imag))
    ref = lax.complex(jnp.tanh(x_re), jnp.tanh(x_im))
    assert out.shape == x.shape and out.dtype == jnp.complex64
    assert jnp.allclose(out, ref, atol=1e-6, rtol=1e-6)

    print("KERNEL_OK")
</pallas_src>

<mosaic_0001>
module attributes {stable_mosaic.version = 11 : i64} {
  func.func @_tanh_kernel(%arg0: i32, %arg1: memref<2x2048xf32, #tpu.memory_space<vmem>>, %arg2: memref<2x2048xf32, #tpu.memory_space<vmem>>) attributes {dimension_semantics = [#tpu.dimension_semantics<parallel>], iteration_bounds = array<i64: 1>, scalar_prefetch = 0 : i64, scratch_operands = 0 : i64, tpu.core_type = #tpu.core_type<tc>, window_params = [{transform_indices = @transform_0, window_bounds = array<i64: 2, 2048>}, {transform_indices = @transform_1, window_bounds = array<i64: 2, 2048>}]} {
    %c0 = arith.constant 0 : index
    %c0_0 = arith.constant 0 : index
    %0 = vector.load %arg1[%c0, %c0_0] : memref<2x2048xf32, #tpu.memory_space<vmem>>, vector<2x2048xf32>
    %1 = math.tanh %0 : vector<2x2048xf32>
    %c0_1 = arith.constant 0 : index
    %c0_2 = arith.constant 0 : index
    %2 = vector.load %arg2[%c0_1, %c0_2] : memref<2x2048xf32, #tpu.memory_space<vmem>>, vector<2x2048xf32>
    tpu.vector_store %arg2[%c0_1, %c0_2], %1 {strides = array<i32>} : memref<2x2048xf32, #tpu.memory_space<vmem>>, vector<2x2048xf32>,
    return
  }
  func.func @transform_0(%arg0: i32) -> (i32, i32) {
    %c0_i32 = arith.constant 0 : i32
    %c0_i32_0 = arith.constant 0 : i32
    return %arg0, %c0_i32 : i32, i32
  }
  func.func @transform_1(%arg0: i32) -> (i32, i32) {
    %c0_i32 = arith.constant 0 : i32
    %c0_i32_0 = arith.constant 0 : i32
    return %arg0, %c0_i32 : i32, i32
  }
}

</mosaic_0001>

<llo_original>
// kernel: custom-call.1
$region0: #{custom-call.1}
  %s0 = inlined_call_operand.hbm [shape: c64[2,4,16,16], index: 0, kind: input, shape index: {}]
  %s1 = inlined_call_operand.vmem [shape: f32[2,4,16,16], index: 1, kind: output, shape index: {}]
  %s2 = scalar_lea.hbm %s0, 2048
  $region1: #{custom-call.1} parent=0
    #allocation0 [shape = 's32[1]{0}', space=sflag, size = 0x4, scoped, tag = 'scoped memory for custom-call.1']
    %3 = vsyncpa [#allocation0], 0
    %s4 = sshll.u32 %s1, 4
    %s5 = int_to_ptr.vmem [resolvable:$true] %s4
    %7 = dma.hbm_to_vmem [thread:$0]  %s2, 2048, %s5, [#allocation0]
    %8 = dma.done [#allocation0], 2048
    %9 = vsyncpa [#allocation0], 1

// kernel: custom-call
$region0: #{custom-call}
  %s0 = inlined_call_operand.hbm [shape: c64[2,4,16,16], index: 0, kind: input, shape index: {}]
  %s1 = inlined_call_operand.vmem [shape: f32[2,4,16,16], index: 1, kind: output, shape index: {}]
  $region1: #{custom-call} parent=0
    #allocation0 [shape = 's32[1]{0}', space=sflag, size = 0x4, scoped, tag = 'scoped memory for custom-call']
    %2 = vsyncpa [#allocation0], 0
    %s3 = sshll.u32 %s1, 4
    %s4 = int_to_ptr.vmem [resolvable:$true] %s3
    %6 = dma.hbm_to_vmem [thread:$0]  %s0, 2048, %s4, [#allocation0]
    %7 = dma.done [#allocation0], 2048
    %8 = vsyncpa [#allocation0], 1

// kernel: custom-call.2
$region0: #{custom-call.2}
  %s0 = inlined_call_operand.vmem [shape: f32[2,4,16,16], index: 0, kind: input, shape index: {}]
  %s1 = inlined_call_operand.vmem [shape: f32[2,4,16,16], index: 1, kind: input, shape index: {}]
  %s2 = inlined_call_operand.hbm [shape: c64[2,4,16,16], index: 2, kind: output, shape index: {}]
  %s3 = scalar_lea.hbm %s2, 2048
  $region1: #{custom-call.2} parent=0
    #allocation0 [shape = 's32[1]{0}', space=sflag, size = 0x4, scoped, tag = 'scoped memory for custom-call.2']
    %4 = vsyncpa [#allocation0], 0
    %s5 = sshll.u32 %s0, 4
    %s6 = int_to_ptr.vmem [resolvable:$true] %s5
    %8 = dma.vmem_to_hbm [thread:$0]  %s6, 2048, %s2, [#allocation0]
    %9 = dma.done [#allocation0], 2048
    %10 = vsyncpa [#allocation0], 1
  $region2: #{custom-call.2} parent=0
    #allocation1 [shape = 's32[1]{0}', space=sflag, size = 0x4, scoped, tag = 'scoped memory for custom-call.2']
    %11 = vsyncpa [#allocation1], 0
    %s12 = sshll.u32 %s1, 4
    %s13 = int_to_ptr.vmem [resolvable:$true] %s12
    %15 = dma.vmem_to_hbm [thread:$0]  %s13, 2048, %s3, [#allocation1]
    %16 = dma.done [#allocation1], 2048
    %17 = vsyncpa [#allocation1], 1

// kernel: complex_tanh.1
$region0: #{complex_tanh.1}
  #allocation0 [shape = 'u32[]', space=smem, size = 0x4, offset = 0x4, fixed_abs, tag = 'smem constant byte address 0x4 - core index']
  #allocation1 [shape = 'u32[144,128]{1,0:T(1,128)}', space=vmem, size = 0x12000, scoped, tag = 'internal scratch']
  %s0 = inlined_call_operand.vmem [shape: f32[2,2048], index: 0, kind: input, shape index: {}, may-alias: {0,1}]
  %s1 = inlined_call_operand.vmem [shape: f32[2,2048], index: 1, kind: output, shape index: {}, may-alias: {0,1}]
  %s2 = sld [smem:[#allocation0]]
  $region14: #{complex_tanh.1} parent=0
    _
  %s4 = ssub.s32 1, %s2
  %s5 = scalar_select 0, %s4, %s2
  // Predicated region
  $region2: #{complex_tanh.1} parent=0 // pred_check
    _
  $region3: #{complex_tanh.1} parent=0 // pred_check_branch
    %7 = sbr.rel (0) target = $region5
  $region4: #{complex_tanh.1} parent=0 // pred_region
    _
  $region5: #{complex_tanh.1} parent=0 // pred_fallthru
    _
  %v8 = vld [vmem:[%s0] sm:$0xff]
  %v9 = vld [vmem:[%s0 + $0x8] sm:$0xff]
  %v10 = vld [vmem:[%s0 + $0x10] sm:$0xff]
  %v11 = vld [vmem:[%s0 + $0x18] sm:$0xff]
  %v12 = vtanh.pop %v8
  %v13 = vtanh.pop %v9
  %v14 = vtanh.pop %v10
  %v15 = vtanh.pop %v11
  %16 = vst [vmem:[%s1] sm:$0xff] %v12
  %17 = vst [vmem:[%s1 + $0x8] sm:$0xff] %v13
  %18 = vst [vmem:[%s1 + $0x10] sm:$0xff] %v14
  %19 = vst [vmem:[%s1 + $0x18] sm:$0xff] %v15
  // Predicated region
  $region6: #{complex_tanh.1} parent=0 // pred_check
    _
  $region7: #{complex_tanh.1} parent=0 // pred_check_branch
    %21 = sbr.rel (0) target = $region9
  $region8: #{complex_tanh.1} parent=0 // pred_region
    _
  $region9: #{complex_tanh.1} parent=0 // pred_fallthru
    _
  // Predicated region
  $region10: #{complex_tanh.1} parent=0 // pred_check
    _
  $region11: #{complex_tanh.1} parent=0 // pred_check_branch
    %23 = sbr.rel (0) target = $region13
  $region12: #{complex_tanh.1} parent=0 // pred_region
    _
  $region13: #{complex_tanh.1} parent=0 // pred_fallthru
    _

</llo_original>
